<compile_context>
chip_gen: v6e
topology: v6e:2x2x1
jax: 0.10.0
libtpu: 0.0.40
codegen_flags: <defaults>
</compile_context>

<pallas_src>
import functools
import math

import jax
import jax.numpy as jnp
from jax.experimental import pallas as pl
from jax.experimental.pallas import tpu as pltpu


# ----------------------------------------------------------------------------
# Parameter ("buffer") construction — deterministic, mirrors nn.Module.__init__
# ----------------------------------------------------------------------------
def build_pe_table(embed_dim: int, window_size: int, standard_length: int = 16):
    """pe buffer of shape (1, standard_length + window_size, embed_dim), f32."""
    max_seq_length = standard_length + window_size
    position = jnp.arange(max_seq_length, dtype=jnp.float32)[:, None]            # (L, 1)
    div_term = jnp.exp(
        jnp.arange(0, embed_dim, 2, dtype=jnp.float32) * (-math.log(10000.0) / embed_dim)
    )                                                                             # (D/2,)
    angles = position * div_term                                                  # (L, D/2)
    pe = jnp.zeros((max_seq_length, embed_dim), dtype=jnp.float32)
    pe = pe.at[:, 0::2].set(jnp.sin(angles))
    pe = pe.at[:, 1::2].set(jnp.cos(angles))
    return pe[None, :, :]                                                         # (1, L, D)


def build_effective_pe(pe, seq_length, *, standard_length, total_frame_num, window_size):
    """Replicates the branchy slicing of forward() -> effective PE of shape (S, D).

    All branch conditions depend only on static shapes (compile-time glue).  The
    asserts make the original module's implicit broadcasting requirements explicit.
    """
    pe2d = pe[0]  # (L, D)
    if seq_length == standard_length:
        start = 0 if total_frame_num == standard_length else 1
        return pe2d[start:start + seq_length, :]
    elif seq_length > standard_length:
        # Original module only broadcasts cleanly when this holds.
        assert seq_length == window_size + standard_length, (
            "seq_length > standard_length requires seq_length == window_size + standard_length")
        win = jnp.repeat(pe2d[0:1, :], window_size, axis=0)
        rem = pe2d[1:1 + standard_length, :]
        return jnp.concatenate([win, rem], axis=0)
    else:  # seq_length < standard_length
        assert seq_length >= window_size, (
            "seq_length < standard_length requires seq_length >= window_size")
        win = jnp.repeat(pe2d[0:1, :], window_size, axis=0)
        rem = pe2d[1:1 + (seq_length - window_size), :]
        return jnp.concatenate([win, rem], axis=0)


# ----------------------------------------------------------------------------
# Pallas kernel: out[r, c] = x[r, c] + pe_flat[0, c]   (flattened (B, S*D) view)
# ----------------------------------------------------------------------------
def _add_pe_kernel(x_ref, pe_ref, o_ref):
    # x_ref / o_ref: (tb, tc); pe_ref: (1, tc) — sublane-broadcast add on the VPU.
    o_ref[...] = x_ref[...] + pe_ref[...]


def sinusoidal_pos_emb_forward(
    x, pe, *, standard_length, total_frame_num, window_size,
    min_pallas_bytes: int = 1 << 20,      # below this, a fused XLA add is strictly faster
    block_bytes: int = 2 * 1024 * 1024,   # per-block budget; safe on v5e/v6e/v7x defaults
):
    B, S, D = x.shape
    pe_eff = build_effective_pe(
        pe, S,
        standard_length=standard_length,
        total_frame_num=total_frame_num,
        window_size=window_size,
    ).astype(x.dtype)                      # (S, D); cast once (output dtype matches module)
    assert pe_eff.shape == (S, D)

    itemsize = jnp.dtype(x.dtype).itemsize
    total_bytes = B * S * D * itemsize

    # Small-input fallback: pallas_call fixed overhead dominates tiny shapes.
    if total_bytes < min_pallas_bytes:
        return x + pe_eff[None]

    SD = S * D
    x2 = x.reshape(B, SD)                  # lane-dense 2-D view
    pe2 = pe_eff.reshape(1, SD)            # (1, S*D), broadcast over batch rows

    lane = 128
    sublane = max(8, 32 // itemsize)       # f32: 8, bf16: 16, int8/fp8: 32

    # ---- Row tile first: full batch when small, else an aligned chunk. ----
    if B <= sublane:
        tb = B                             # full extent -> always a legal block dim
    else:
        tb = min((B // sublane) * sublane, 8 * sublane)
    grid_rows = pl.cdiv(B, tb)             # ragged edge (if any) is masked by Pallas

    # ---- Column tile from the remaining per-block budget (lane-aligned). ----
    # Account for sublane padding: a (tb, tc) block occupies ceil(tb/sublane)*sublane
    # physical sublanes in VMEM, so budget on the padded footprint.
    padded_tb = -(-tb // sublane) * sublane
    budget_cols = max(lane, (block_bytes // (padded_tb * itemsize)) // lane * lane)
    if SD <= budget_cols:
        tc = SD                            # full extent -> always legal (covers SD % 128 != 0)
    else:
        tc = budget_cols                   # multiple of 128; ragged edge masked via cdiv
    grid_cols = pl.cdiv(SD, tc)

    # PE-varying (column) axis OUTER so consecutive inner (row) steps reuse the same
    # PE block index and Pallas elides the re-fetch: PE read once per column block.
    grid = (grid_cols, grid_rows)

    out2 = pl.pallas_call(
        _add_pe_kernel,
        out_shape=jax.ShapeDtypeStruct((B, SD), x.dtype),
        grid_spec=pltpu.PrefetchScalarGridSpec(
            num_scalar_prefetch=0,
            grid=grid,
            in_specs=[
                pl.BlockSpec((tb, tc), lambda j, i: (i, j)),   # x tile
                pl.BlockSpec((1, tc), lambda j, i: (0, j)),    # PE tile (reused over rows)
            ],
            out_specs=pl.BlockSpec((tb, tc), lambda j, i: (i, j)),
        ),
        compiler_params=pltpu.CompilerParams(
            dimension_semantics=("parallel", "parallel"),
        ),
        # x is in-place safe for the add; lets XLA reuse the buffer when donatable.
        input_output_aliases={0: 0},
        cost_estimate=pl.CostEstimate(
            flops=B * SD,
            transcendentals=0,
            bytes_accessed=(2 * B * SD + SD) * itemsize,
        ),
    )(x2, pe2)

    return out2.reshape(B, S, D)


# ----------------------------------------------------------------------------
# Reference (plain JAX) for sanity check
# ----------------------------------------------------------------------------
def reference_forward(x, pe, *, standard_length, total_frame_num, window_size):
    pe_eff = build_effective_pe(
        pe, x.shape[1],
        standard_length=standard_length,
        total_frame_num=total_frame_num,
        window_size=window_size,
    ).astype(x.dtype)
    return x + pe_eff[None]


if __name__ == "__main__":
    window_size = 5
    total_frame_num = 32
    standard_length = 16
    cfg = dict(standard_length=standard_length,
               total_frame_num=total_frame_num,
               window_size=window_size)

    key = jax.random.PRNGKey(0)

    def check(x, pe_tab, **kw):
        ref = reference_forward(x, pe_tab, **cfg)           # compute ref first (aliasing)
        out = jax.block_until_ready(
            sinusoidal_pos_emb_forward(x, pe_tab, **cfg, **kw))
        assert out.shape == x.shape and out.dtype == x.dtype
        assert jnp.allclose(out, ref, atol=1e-6, rtol=1e-6)

    # 1) Demo shape (B=2, S=16, D=32), seq_length == standard_length branch,
    #    forced through the Pallas path so the kernel itself is exercised.
    embed_dim = 32
    pe_tab = build_pe_table(embed_dim, window_size, standard_length)          # (1, 21, 32)
    x1 = jax.random.normal(key, (2, 16, embed_dim), dtype=jnp.float32)
    check(x1, pe_tab, min_pallas_bytes=0)

    # 2) seq_length > standard_length branch (S = 21), forced through Pallas.
    x2 = jax.random.normal(jax.random.fold_in(key, 1),
                           (2, standard_length + window_size, embed_dim),
                           dtype=jnp.float32)
    check(x2, pe_tab, min_pallas_bytes=0)

    # 3) Larger shape through the default dispatch: exercises the multi-column grid
    #    (grid_cols = 2) with the PE block reused across inner row steps.
    embed_dim3 = 8192
    pe_tab3 = build_pe_table(embed_dim3, window_size, standard_length)
    x3 = jax.random.normal(jax.random.fold_in(key, 2),
                           (2, 16, embed_dim3), dtype=jnp.float32)            # 1 MiB
    check(x3, pe_tab3)

    print("KERNEL_OK")
</pallas_src>

<mosaic_0001>
module attributes {stable_mosaic.version = 11 : i64} {
  func.func @_add_pe_kernel(%arg0: i32, %arg1: i32, %arg2: memref<2x512xf32, #tpu.memory_space<vmem>>, %arg3: memref<1x512xf32, #tpu.memory_space<vmem>>, %arg4: memref<2x512xf32, #tpu.memory_space<vmem>>) attributes {dimension_semantics = [#tpu.dimension_semantics<parallel>, #tpu.dimension_semantics<parallel>], iteration_bounds = array<i64: 1, 1>, scalar_prefetch = 0 : i64, scratch_operands = 0 : i64, tpu.core_type = #tpu.core_type<tc>, window_params = [{transform_indices = @transform_0, window_bounds = array<i64: 2, 512>}, {transform_indices = @transform_1, window_bounds = array<i64: 1, 512>}, {transform_indices = @transform_2, window_bounds = array<i64: 2, 512>}]} {
    %c0 = arith.constant 0 : index
    %c0_0 = arith.constant 0 : index
    %0 = vector.load %arg2[%c0, %c0_0] : memref<2x512xf32, #tpu.memory_space<vmem>>, vector<2x512xf32>
    %c0_1 = arith.constant 0 : index
    %c0_2 = arith.constant 0 : index
    %1 = vector.load %arg3[%c0_1, %c0_2] : memref<1x512xf32, #tpu.memory_space<vmem>>, vector<1x512xf32>
    %2 = vector.broadcast %1 : vector<1x512xf32> to vector<2x512xf32>
    %3 = arith.addf %0, %2 : vector<2x512xf32>
    %c0_3 = arith.constant 0 : index
    %c0_4 = arith.constant 0 : index
    %4 = vector.load %arg4[%c0_3, %c0_4] : memref<2x512xf32, #tpu.memory_space<vmem>>, vector<2x512xf32>
    tpu.vector_store %arg4[%c0_3, %c0_4], %3 {strides = array<i32>} : memref<2x512xf32, #tpu.memory_space<vmem>>, vector<2x512xf32>,
    return
  }
  func.func @transform_0(%arg0: i32, %arg1: i32) -> (i32, i32) {
    %c0_i32 = arith.constant 0 : i32
    return %arg1, %arg0 : i32, i32
  }
  func.func @transform_1(%arg0: i32, %arg1: i32) -> (i32, i32) {
    %c0_i32 = arith.constant 0 : i32
    %c0_i32_0 = arith.constant 0 : i32
    return %c0_i32, %arg0 : i32, i32
  }
  func.func @transform_2(%arg0: i32, %arg1: i32) -> (i32, i32) {
    %c0_i32 = arith.constant 0 : i32
    return %arg1, %arg0 : i32, i32
  }
}

</mosaic_0001>

<llo_original>
// kernel: tpu_custom_call.1
$region0: #{tpu_custom_call.1}
  #allocation0 [shape = 'u32[]', space=smem, size = 0x4, offset = 0x4, fixed_abs, tag = 'smem constant byte address 0x4 - core index']
  #allocation1 [shape = 'u32[144,128]{1,0:T(1,128)}', space=vmem, size = 0x12000, scoped, tag = 'internal scratch']
  %s0 = inlined_call_operand.hbm [shape: f32[2,512], index: 0, kind: input, shape index: {}, may-alias: {0,2}]
  %s1 = inlined_call_operand.vmem [shape: f32[1,512], index: 1, kind: input, shape index: {}]
  %s2 = inlined_call_operand.hbm [shape: f32[2,512], index: 2, kind: output, shape index: {}, may-alias: {0,2}]
  %s3 = sld [smem:[#allocation0]]
  $region22: #{tpu_custom_call.1} parent=0
    _
  %s5 = ssub.s32 1, %s3
  %s6 = scalar_select 0, %s5, %s3
  $region1: #{tpu_custom_call.1} parent=0
    #allocation2 [shape = 'u8[4096]{0}', space=vmem, size = 0x1000, scoped, tag = 'input window, operand 0, single buffered']
    #allocation3 [shape = 's32[1]{0}', space=sflag, size = 0x4, scoped, tag = 'scoped memory for tpu_custom_call.1']
    #allocation4 [shape = 's32[1]{0}', space=sflag, size = 0x4, scoped, tag = 'scoped memory for tpu_custom_call.1']
    #allocation5 [shape = 'u8[4096]{0}', space=vmem, size = 0x1000, scoped, tag = 'output window, operand 0, single buffered']
    %7 = vsyncpa [#allocation3], 0
    %8 = vsyncpa [#allocation4], 0
    // Predicated region
    $region2: #{tpu_custom_call.1} parent=1 // pred_check
      _
    $region3: #{tpu_custom_call.1} parent=1 // pred_check_branch
      %10 = sbr.rel (0) target = $region5
    $region4: #{tpu_custom_call.1} parent=1 // pred_region
      %s12 = ssub.s32 128, 128
      %13 = vsyncadd [#allocation3], %s12
      %s15 = sshll.u32 [#allocation2], 4
      %s16 = int_to_ptr.vmem [resolvable:$true] %s15
      %18 = dma.hbm_to_vmem [thread:$0]  %s0, 128, %s16, [#allocation3]
    $region5: #{tpu_custom_call.1} parent=1 // pred_fallthru
      _
    // Predicated region
    $region6: #{tpu_custom_call.1} parent=1 // pred_check
      _
    $region7: #{tpu_custom_call.1} parent=1 // pred_check_branch
      %20 = sbr.rel (0) target = $region9
    $region8: #{tpu_custom_call.1} parent=1 // pred_region
      _
    $region9: #{tpu_custom_call.1} parent=1 // pred_fallthru
      _
    // Predicated region
    $region10: #{tpu_custom_call.1} parent=1 // pred_check
      _
    $region11: #{tpu_custom_call.1} parent=1 // pred_check_branch
      %22 = sbr.rel (0) target = $region13
    $region12: #{tpu_custom_call.1} parent=1 // pred_region
      %23 = dma.done [#allocation3], 128
    $region13: #{tpu_custom_call.1} parent=1 // pred_fallthru
      _
    %v24 = vld [vmem:[#allocation2] sm:$0xff]
    %v25 = vld [vmem:[%s1] sm:$0xf]
    %v27 = vlaneseq
    %v28 = vshrl.u32 %v27, 7
    %v29 = vsub.s32 0, %v28
    %v30 = vrot.slane %v25, %v29
    %v31 = vlaneseq
    %v32 = vshrl.u32 %v31, 7
    %v33 = vsub.s32 1, %v32
    %v34 = vrot.slane %v25, %v33
    %v35 = vlaneseq
    %v36 = vshrl.u32 %v35, 7
    %v37 = vsub.s32 2, %v36
    %v38 = vrot.slane %v25, %v37
    %v39 = vlaneseq
    %v40 = vshrl.u32 %v39, 7
    %v41 = vsub.s32 3, %v40
    %v42 = vrot.slane %v25, %v41
    %v43 = vcombine.low %v30, %v34
    %v44 = vcombine.low %v38, %v42
    %v46 = vunpack.c.l.s4 1983009808
    %v47 = vunpack.c.0.s8 %v46
    %v48 = vlaneseq
    %v49 = vshrl.u32 %v48, 7
    %v50 = vsub.s32 %v47, %v49
    %v51 = vrot.slane %v43, %v50
    %v53 = vunpack.c.l.s4 1983009808
    %v54 = vunpack.c.0.s8 %v53
    %v55 = vlaneseq
    %v56 = vshrl.u32 %v55, 7
    %v57 = vsub.s32 %v54, %v56
    %v58 = vrot.slane %v44, %v57
    %v59 = vcombine.low %v51, %v58
    %v61 = vadd.f32 %v24, %v59
    %62 = vst [vmem:[#allocation5] sm:$0xff] %v61
    // Predicated region
    $region14: #{tpu_custom_call.1} parent=1 // pred_check
      _
    $region15: #{tpu_custom_call.1} parent=1 // pred_check_branch
      %64 = sbr.rel (0) target = $region17
    $region16: #{tpu_custom_call.1} parent=1 // pred_region
      %s66 = ssub.s32 128, 128
      %67 = vsyncadd [#allocation4], %s66
      %s69 = sshll.u32 [#allocation5], 4
      %s70 = int_to_ptr.vmem [resolvable:$true] %s69
      %72 = dma.vmem_to_hbm [thread:$0]  %s70, 128, %s2, [#allocation4]
    $region17: #{tpu_custom_call.1} parent=1 // pred_fallthru
      _
    // Predicated region
    $region18: #{tpu_custom_call.1} parent=1 // pred_check
      _
    $region19: #{tpu_custom_call.1} parent=1 // pred_check_branch
      %74 = sbr.rel (0) target = $region21
    $region20: #{tpu_custom_call.1} parent=1 // pred_region
      %75 = dma.done [#allocation4], 128
    $region21: #{tpu_custom_call.1} parent=1 // pred_fallthru
      _
    %76 = vsyncpa [#allocation3], 1
    %77 = vsyncpa [#allocation4], 1

</llo_original>
